<compile_context>
chip_gen: v7x
topology: tpu7x:2x2x1
jax: 0.10.0
libtpu: 0.0.40
codegen_flags: <defaults>
</compile_context>

<pallas_src>
import functools

import jax
import jax.numpy as jnp
from jax.experimental import pallas as pl
from jax.experimental.pallas import tpu as pltpu

IN_DIM = 60
HID_DIM = 256
OUT_DIM = 60
BN_EPS = 1e-5

PAD_IN = 128    # lane-padded input feature dim
PAD_OUT = 128   # lane-padded output feature dim

_AUTO_TILE_THRESHOLD = 2048          # above this batch size, use the tiled path
_DEFAULT_TILE_B = 2048               # ~10-12 MiB per-tile footprint incl. temporaries
_VMEM_LIMIT_BYTES = 32 * 1024 * 1024  # explicit scoped-VMEM budget (safe on v5e/v6e/v7x)


# ----------------------------------------------------------------------------
# Monolithic kernel (whole batch resident in VMEM) — small/medium B.
# ----------------------------------------------------------------------------
def _prediction_kernel(x_ref, w1_ref, gamma_ref, beta_ref, w2_ref, b2_ref,
                       o_ref, *, compute_dtype):
    # ---- Linear(60->256), lane-padded to 128 input columns ----
    x = x_ref[...].astype(compute_dtype)                                  # (B, 128)
    h = jnp.dot(x, w1_ref[...], preferred_element_type=jnp.float32)      # (B, 256) f32
    # Linear-1 bias dropped: training-mode BN subtracts the batch mean, so a
    # constant per-column bias cancels exactly.

    # ---- BatchNorm1d(256) training-mode batch statistics (biased var) ----
    mean = jnp.mean(h, axis=0, keepdims=True)                             # (1, 256)
    hc = h - mean
    var = jnp.mean(hc * hc, axis=0, keepdims=True)                        # (1, 256)
    scale = gamma_ref[...] * jax.lax.rsqrt(var + BN_EPS)                  # (1, 256)

    # ---- fused normalize + affine + ReLU ----
    a = jnp.maximum(hc * scale + beta_ref[...], 0.0)                      # (B, 256) f32

    # ---- Linear(256->60), lane-padded to 128 output columns ----
    o = jnp.dot(a.astype(compute_dtype), w2_ref[...],
                preferred_element_type=jnp.float32)                       # (B, 128)
    o_ref[...] = o + b2_ref[...]


def _forward_monolithic(x_pad, w1p, gamma, beta, w2p, b2p, compute_dtype):
    B = x_pad.shape[0]
    xb = int(x_pad.dtype.itemsize)
    wb = int(jnp.dtype(compute_dtype).itemsize)
    vmem = pl.BlockSpec(memory_space=pltpu.MemorySpace.VMEM)
    flops = 2 * B * (PAD_IN * HID_DIM + HID_DIM * PAD_OUT) + 8 * B * HID_DIM
    bytes_accessed = int(xb * B * PAD_IN + 4 * B * PAD_OUT
                         + wb * (PAD_IN * HID_DIM + HID_DIM * PAD_OUT)
                         + 4 * (3 * HID_DIM + PAD_OUT))
    return pl.pallas_call(
        functools.partial(_prediction_kernel, compute_dtype=compute_dtype),
        out_shape=jax.ShapeDtypeStruct((B, PAD_OUT), jnp.float32),
        in_specs=[vmem] * 6,
        out_specs=vmem,
        compiler_params=pltpu.CompilerParams(vmem_limit_bytes=_VMEM_LIMIT_BYTES),
        cost_estimate=pl.CostEstimate(flops=flops, transcendentals=HID_DIM,
                                      bytes_accessed=bytes_accessed),
    )(x_pad, w1p, gamma, beta, w2p, b2p)


# ----------------------------------------------------------------------------
# Two-pass batch-tiled path — large B (BN stats couple the whole batch).
# Pass 1: stats only (per-tile partial moments).  Pass 2: recompute Linear1 and
# fuse normalize + ReLU + Linear2.  No (Bp,256) intermediate ever hits HBM.
# ----------------------------------------------------------------------------
def _lin1_stats_kernel(x_ref, w1_ref, part_ref, *, compute_dtype):
    h = jnp.dot(x_ref[...].astype(compute_dtype), w1_ref[...],
                preferred_element_type=jnp.float32)                       # (TB, 256) f32
    # Zero-padded batch rows give h == 0 (no Linear1 bias) => stats-neutral.
    s = jnp.sum(h, axis=0, keepdims=True)                                 # (1, 256)
    sq = jnp.sum(h * h, axis=0, keepdims=True)                            # (1, 256)
    pad = jnp.zeros((6, HID_DIM), jnp.float32)
    part_ref[...] = jnp.concatenate([s, sq, pad], axis=0)                 # (8, 256)


def _fused_fwd_kernel(x_ref, w1_ref, scale_ref, shift_ref, w2_ref, b2_ref,
                      o_ref, *, compute_dtype):
    h = jnp.dot(x_ref[...].astype(compute_dtype), w1_ref[...],
                preferred_element_type=jnp.float32)                       # (TB, 256) f32
    a = jnp.maximum(h * scale_ref[...] + shift_ref[...], 0.0)             # (TB, 256)
    o = jnp.dot(a.astype(compute_dtype), w2_ref[...],
                preferred_element_type=jnp.float32)                       # (TB, 128)
    o_ref[...] = o + b2_ref[...]


def _forward_tiled(x_pad, w1p, gamma, beta, w2p, b2p, compute_dtype, tile_b):
    assert tile_b % 8 == 0, "batch tile must be a multiple of 8 (sublane)"
    B = x_pad.shape[0]                       # true batch rows
    nb = pl.cdiv(B, tile_b)
    Bp = nb * tile_b
    if Bp != B:
        # Zero rows are statistics-neutral ONLY because Linear-1 bias is dropped.
        x_pad = jnp.pad(x_pad, ((0, Bp - B), (0, 0)))

    xb = int(x_pad.dtype.itemsize)
    wb = int(jnp.dtype(compute_dtype).itemsize)

    # ---- pass 1: per-tile partial sum / sum-of-squares (megacore parallel) ----
    flops1 = 2 * Bp * PAD_IN * HID_DIM + 3 * Bp * HID_DIM
    bytes1 = int(xb * Bp * PAD_IN + wb * PAD_IN * HID_DIM + 4 * nb * 8 * HID_DIM)
    parts = pl.pallas_call(
        functools.partial(_lin1_stats_kernel, compute_dtype=compute_dtype),
        grid=(nb,),
        in_specs=(
            pl.BlockSpec((tile_b, PAD_IN), lambda i: (i, 0)),
            pl.BlockSpec((PAD_IN, HID_DIM), lambda i: (0, 0)),
        ),
        out_specs=pl.BlockSpec((8, HID_DIM), lambda i: (i, 0)),
        out_shape=jax.ShapeDtypeStruct((nb * 8, HID_DIM), jnp.float32),
        compiler_params=pltpu.CompilerParams(
            dimension_semantics=("parallel",),
            vmem_limit_bytes=_VMEM_LIMIT_BYTES),
        cost_estimate=pl.CostEstimate(flops=flops1, transcendentals=0,
                                      bytes_accessed=bytes1),
    )(x_pad, w1p)

    # ---- finalize stats (tiny (1,256) f32 ops) ----
    parts = parts.reshape(nb, 8, HID_DIM)
    s = jnp.sum(parts[:, 0, :], axis=0, keepdims=True)                    # (1, 256)
    sq = jnp.sum(parts[:, 1, :], axis=0, keepdims=True)                   # (1, 256)
    mean = s / float(B)
    # TODO(synk): E[h^2]-mean^2 in f32 can lose precision if |mean| >> std;
    # switch to centered per-tile moments (Welford) if activation scales grow.
    var = jnp.maximum(sq / float(B) - mean * mean, 0.0)                   # biased var
    scale = gamma * jax.lax.rsqrt(var + BN_EPS)
    shift = beta - mean * scale

    # ---- pass 2: recompute Linear1 + normalize + ReLU + Linear2 (parallel) ----
    flops2 = 2 * Bp * (PAD_IN * HID_DIM + HID_DIM * PAD_OUT) + 4 * Bp * HID_DIM
    bytes2 = int(xb * Bp * PAD_IN + 4 * Bp * PAD_OUT
                 + wb * (PAD_IN * HID_DIM + HID_DIM * PAD_OUT)
                 + 4 * (2 * HID_DIM + PAD_OUT))
    out = pl.pallas_call(
        functools.partial(_fused_fwd_kernel, compute_dtype=compute_dtype),
        grid=(nb,),
        in_specs=(
            pl.BlockSpec((tile_b, PAD_IN), lambda i: (i, 0)),
            pl.BlockSpec((PAD_IN, HID_DIM), lambda i: (0, 0)),
            pl.BlockSpec((1, HID_DIM), lambda i: (0, 0)),
            pl.BlockSpec((1, HID_DIM), lambda i: (0, 0)),
            pl.BlockSpec((HID_DIM, PAD_OUT), lambda i: (0, 0)),
            pl.BlockSpec((1, PAD_OUT), lambda i: (0, 0)),
        ),
        out_specs=pl.BlockSpec((tile_b, PAD_OUT), lambda i: (i, 0)),
        out_shape=jax.ShapeDtypeStruct((Bp, PAD_OUT), jnp.float32),
        compiler_params=pltpu.CompilerParams(
            dimension_semantics=("parallel",),
            vmem_limit_bytes=_VMEM_LIMIT_BYTES),
        cost_estimate=pl.CostEstimate(flops=flops2, transcendentals=0,
                                      bytes_accessed=bytes2),
    )(x_pad, w1p, scale, shift, w2p, b2p)
    return out


# ----------------------------------------------------------------------------
# Wrapper: parameter prep (lane padding, optional bf16) + path selection.
# ----------------------------------------------------------------------------
def prepare_params(params, compute_dtype=jnp.float32):
    w1, b1, gamma, beta, w2, b2 = params
    del b1  # cancels exactly under training-mode BatchNorm (mean subtraction)
    w1p = jnp.pad(w1, ((0, PAD_IN - IN_DIM), (0, 0))).astype(compute_dtype)
    w2p = jnp.pad(w2, ((0, 0), (0, PAD_OUT - OUT_DIM))).astype(compute_dtype)
    b2p = jnp.pad(b2, ((0, 0), (0, PAD_OUT - OUT_DIM)))                   # f32
    return w1p, gamma, beta, w2p, b2p


def _forward_from_prepared(x, prepared, compute_dtype, batch_tile):
    w1p, gamma, beta, w2p, b2p = prepared
    B = x.shape[0]
    x_pad = jnp.pad(x, ((0, 0), (0, PAD_IN - IN_DIM)))                    # (B, 128)
    if jnp.dtype(compute_dtype) != jnp.dtype(jnp.float32):
        x_pad = x_pad.astype(compute_dtype)   # HBM-resident bf16 input: halves x traffic

    if batch_tile is None and B > _AUTO_TILE_THRESHOLD:
        batch_tile = _DEFAULT_TILE_B

    if batch_tile is None or B <= batch_tile:
        out = _forward_monolithic(x_pad, w1p, gamma, beta, w2p, b2p, compute_dtype)
    else:
        out = _forward_tiled(x_pad, w1p, gamma, beta, w2p, b2p, compute_dtype,
                             batch_tile)
    return out[:B, :OUT_DIM]


def prediction_forward(x, params, *, compute_dtype=jnp.float32, batch_tile=None):
    """x: (B, 60) float32 -> (B, 60) float32."""
    prepared = prepare_params(params, compute_dtype)
    return _forward_from_prepared(x, prepared, compute_dtype, batch_tile)


def make_prediction_fn(params, *, compute_dtype=jnp.float32, batch_tile=None):
    """Pre-pads / pre-casts parameters once and returns a jitted forward fn."""
    prepared = prepare_params(params, compute_dtype)

    def fwd(x):
        return _forward_from_prepared(x, prepared, compute_dtype, batch_tile)

    return jax.jit(fwd)


# ----------------------------------------------------------------------------
# Deterministic synthetic params + pure-JAX reference.
# ----------------------------------------------------------------------------
def init_params(key):
    k1, k2, k3, k4, k5, k6 = jax.random.split(key, 6)
    w1 = jax.random.normal(k1, (IN_DIM, HID_DIM), jnp.float32) * 0.05   # (in, out)
    b1 = jax.random.normal(k2, (1, HID_DIM), jnp.float32) * 0.05
    gamma = 1.0 + 0.1 * jax.random.normal(k3, (1, HID_DIM), jnp.float32)
    beta = 0.1 * jax.random.normal(k4, (1, HID_DIM), jnp.float32)
    w2 = jax.random.normal(k5, (HID_DIM, OUT_DIM), jnp.float32) * 0.05
    b2 = jax.random.normal(k6, (1, OUT_DIM), jnp.float32) * 0.05
    return (w1, b1, gamma, beta, w2, b2)


def prediction_reference(x, params):
    """Pure-JAX reference (keeps b1, proving the in-kernel cancellation is exact)."""
    w1, b1, gamma, beta, w2, b2 = params
    h = x @ w1 + b1
    mean = jnp.mean(h, axis=0, keepdims=True)
    var = jnp.mean((h - mean) ** 2, axis=0, keepdims=True)
    h = (h - mean) / jnp.sqrt(var + BN_EPS)
    h = h * gamma + beta
    h = jnp.maximum(h, 0.0)
    return h @ w2 + b2


# TODO(synk): BatchNorm running-mean/var EMA buffer updates are a training-time
# side effect of the PyTorch module and do not affect the forward output; not modeled.

if __name__ == "__main__":
    key = jax.random.PRNGKey(0)
    kx, kp = jax.random.split(key)
    params = init_params(kp)

    # Path 1: small batch, monolithic kernel, f32.
    B = 8
    x = jax.random.normal(kx, (B, IN_DIM), jnp.float32)
    out = jax.block_until_ready(prediction_forward(x, params))
    ref = prediction_reference(x, params)
    assert out.shape == (B, OUT_DIM)
    assert jnp.allclose(out, ref, atol=1e-4, rtol=1e-4), float(jnp.max(jnp.abs(out - ref)))

    # Path 2: two-pass tiled path (multi-tile + ragged last tile), f32.
    B2 = 20
    x2 = jax.random.normal(jax.random.fold_in(kx, 1), (B2, IN_DIM), jnp.float32)
    out2 = jax.block_until_ready(prediction_forward(x2, params, batch_tile=8))
    ref2 = prediction_reference(x2, params)
    assert out2.shape == (B2, OUT_DIM)
    assert jnp.allclose(out2, ref2, atol=1e-3, rtol=1e-3), float(jnp.max(jnp.abs(out2 - ref2)))

    # Path 3: bf16 MXU inputs (works on v5e/v6e/v7x), f32 accumulation + f32 BN stats.
    out3 = jax.block_until_ready(
        prediction_forward(x, params, compute_dtype=jnp.bfloat16))
    assert jnp.allclose(out3, ref, atol=5e-2, rtol=5e-2), float(jnp.max(jnp.abs(out3 - ref)))

    # Path 4: bf16 tiled path via the pre-prepared / jitted entry point.
    fwd_bf16_tiled = make_prediction_fn(params, compute_dtype=jnp.bfloat16, batch_tile=8)
    out4 = jax.block_until_ready(fwd_bf16_tiled(x2))
    assert out4.shape == (B2, OUT_DIM)
    assert jnp.allclose(out4, ref2, atol=5e-2, rtol=5e-2), float(jnp.max(jnp.abs(out4 - ref2)))

    print("KERNEL_OK")
</pallas_src>

<mosaic_0001>
module attributes {stable_mosaic.version = 11 : i64} {
  func.func @_prediction_kernel(%arg0: memref<8x128xf32, #tpu.memory_space<vmem>>, %arg1: memref<128x256xf32, #tpu.memory_space<vmem>>, %arg2: memref<1x256xf32, #tpu.memory_space<vmem>>, %arg3: memref<1x256xf32, #tpu.memory_space<vmem>>, %arg4: memref<256x128xf32, #tpu.memory_space<vmem>>, %arg5: memref<1x128xf32, #tpu.memory_space<vmem>>, %arg6: memref<8x128xf32, #tpu.memory_space<vmem>>) attributes {dimension_semantics = [], scalar_prefetch = 0 : i64, scratch_operands = 0 : i64, tpu.core_type = #tpu.core_type<tc>} {
    %c0 = arith.constant 0 : index
    %c0_0 = arith.constant 0 : index
    %0 = vector.load %arg0[%c0, %c0_0] : memref<8x128xf32, #tpu.memory_space<vmem>>, vector<8x128xf32>
    %c0_1 = arith.constant 0 : index
    %c0_2 = arith.constant 0 : index
    %1 = vector.load %arg1[%c0_1, %c0_2] : memref<128x256xf32, #tpu.memory_space<vmem>>, vector<128x256xf32>
    %cst = arith.constant dense<0.000000e+00> : vector<8x256xf32>
    %2 = tpu.matmul %0, %1, %cst {dimension_numbers = #tpu.dot_dimension_numbers<[1], [0], [0], [1], [0, 0, 1, 1], [], []>} : vector<8x128xf32>, vector<128x256xf32>, vector<8x256xf32> -> vector<8x256xf32>
    %cst_3 = arith.constant dense<0.000000e+00> : vector<256xf32>
    %3 = vector.multi_reduction <add>, %2, %cst_3 [0] : vector<8x256xf32> to vector<256xf32>
    %4 = vector.shape_cast %3 : vector<256xf32> to vector<1x256xf32>
    %cst_4 = arith.constant 8.000000e+00 : f32
    %5 = vector.broadcast %cst_4 : f32 to vector<1x256xf32>
    %6 = arith.divf %4, %5 : vector<1x256xf32>
    %7 = vector.broadcast %6 : vector<1x256xf32> to vector<8x256xf32>
    %8 = arith.subf %2, %7 : vector<8x256xf32>
    %9 = arith.mulf %8, %8 : vector<8x256xf32>
    %cst_5 = arith.constant dense<0.000000e+00> : vector<256xf32>
    %10 = vector.multi_reduction <add>, %9, %cst_5 [0] : vector<8x256xf32> to vector<256xf32>
    %11 = vector.shape_cast %10 : vector<256xf32> to vector<1x256xf32>
    %cst_6 = arith.constant 8.000000e+00 : f32
    %12 = vector.broadcast %cst_6 : f32 to vector<1x256xf32>
    %13 = arith.divf %11, %12 : vector<1x256xf32>
    %c0_7 = arith.constant 0 : index
    %c0_8 = arith.constant 0 : index
    %14 = vector.load %arg2[%c0_7, %c0_8] : memref<1x256xf32, #tpu.memory_space<vmem>>, vector<1x256xf32>
    %cst_9 = arith.constant 9.99999974E-6 : f32
    %15 = vector.broadcast %cst_9 : f32 to vector<1x256xf32>
    %16 = arith.addf %13, %15 : vector<1x256xf32>
    %17 = math.rsqrt %16 : vector<1x256xf32>
    %18 = arith.mulf %14, %17 : vector<1x256xf32>
    %19 = vector.broadcast %18 : vector<1x256xf32> to vector<8x256xf32>
    %20 = arith.mulf %8, %19 : vector<8x256xf32>
    %c0_10 = arith.constant 0 : index
    %c0_11 = arith.constant 0 : index
    %21 = vector.load %arg3[%c0_10, %c0_11] : memref<1x256xf32, #tpu.memory_space<vmem>>, vector<1x256xf32>
    %22 = vector.broadcast %21 : vector<1x256xf32> to vector<8x256xf32>
    %23 = arith.addf %20, %22 : vector<8x256xf32>
    %cst_12 = arith.constant 0.000000e+00 : f32
    %24 = vector.broadcast %cst_12 : f32 to vector<8x256xf32>
    %25 = arith.maximumf %23, %24 : vector<8x256xf32>
    %c0_13 = arith.constant 0 : index
    %c0_14 = arith.constant 0 : index
    %26 = vector.load %arg4[%c0_13, %c0_14] : memref<256x128xf32, #tpu.memory_space<vmem>>, vector<256x128xf32>
    %cst_15 = arith.constant dense<0.000000e+00> : vector<8x128xf32>
    %27 = tpu.matmul %25, %26, %cst_15 {dimension_numbers = #tpu.dot_dimension_numbers<[1], [0], [0], [1], [0, 0, 1, 1], [], []>} : vector<8x256xf32>, vector<256x128xf32>, vector<8x128xf32> -> vector<8x128xf32>
    %c0_16 = arith.constant 0 : index
    %c0_17 = arith.constant 0 : index
    %28 = vector.load %arg5[%c0_16, %c0_17] : memref<1x128xf32, #tpu.memory_space<vmem>>, vector<1x128xf32>
    %29 = vector.broadcast %28 : vector<1x128xf32> to vector<8x128xf32>
    %30 = arith.addf %27, %29 : vector<8x128xf32>
    %c0_18 = arith.constant 0 : index
    %c0_19 = arith.constant 0 : index
    %31 = vector.load %arg6[%c0_18, %c0_19] : memref<8x128xf32, #tpu.memory_space<vmem>>, vector<8x128xf32>
    tpu.vector_store %arg6[%c0_18, %c0_19], %30 {strides = array<i32>} : memref<8x128xf32, #tpu.memory_space<vmem>>, vector<8x128xf32>,
    return
  }
}

</mosaic_0001>

<llo_original>
// kernel: tpu_custom_call.1
$region0: #{tpu_custom_call.1}
  #allocation0 [shape = 'u32[]', space=smem, size = 0x4, offset = 0x4, fixed_abs, tag = 'smem constant byte address 0x4 - core index']
  #allocation1 [shape = 'u32[144,128]{1,0:T(1,128)}', space=vmem, size = 0x12000, scoped, tag = 'internal scratch']
  %s0 = inlined_call_operand.hbm [shape: f32[8,128], index: 0, kind: input, shape index: {}]
  %s1 = inlined_call_operand.hbm [shape: f32[128,256], index: 1, kind: input, shape index: {}]
  %s2 = inlined_call_operand.vmem [shape: f32[1,256], index: 2, kind: input, shape index: {}]
  %s3 = inlined_call_operand.vmem [shape: f32[1,256], index: 3, kind: input, shape index: {}]
  %s4 = inlined_call_operand.hbm [shape: f32[256,128], index: 4, kind: input, shape index: {}]
  %s5 = inlined_call_operand.vmem [shape: f32[1,128], index: 5, kind: input, shape index: {}]
  %s6 = inlined_call_operand.hbm [shape: f32[8,128], index: 6, kind: output, shape index: {}]
  %s7 = sld [smem:[#allocation0]]
  $region46: #{tpu_custom_call.1} parent=0
    _
  %s9 = ssub.s32 1, %s7
  %s10 = scalar_select 0, %s9, %s7
  $region1: #{tpu_custom_call.1} parent=0
    #allocation2 [shape = 'u8[4096]{0}', space=vmem, size = 0x1000, scoped, tag = 'input window, operand 0, single buffered']
    #allocation3 [shape = 's32[1]{0}', space=sflag, size = 0x4, scoped, tag = 'scoped memory for tpu_custom_call.1']
    #allocation4 [shape = 's32[1]{0}', space=sflag, size = 0x4, scoped, tag = 'scoped memory for tpu_custom_call.1']
    #allocation5 [shape = 'u8[131072]{0}', space=vmem, size = 0x20000, scoped, tag = 'input window, operand 1, single buffered']
    #allocation6 [shape = 's32[1]{0}', space=sflag, size = 0x4, scoped, tag = 'scoped memory for tpu_custom_call.1']
    #allocation7 [shape = 'u8[131072]{0}', space=vmem, size = 0x20000, scoped, tag = 'input window, operand 4, single buffered']
    #allocation8 [shape = 'u8[4096]{0}', space=vmem, size = 0x1000, scoped, tag = 'output window, operand 0, single buffered']
    %11 = vsyncpa [#allocation3], 0
    %12 = vsyncpa [#allocation6], 0
    %13 = vsyncpa [#allocation4], 0
    // Predicated region
    $region2: #{tpu_custom_call.1} parent=1 // pred_check
      _
    $region3: #{tpu_custom_call.1} parent=1 // pred_check_branch
      %15 = sbr.rel (0) target = $region5
    $region4: #{tpu_custom_call.1} parent=1 // pred_region
      %s17 = ssub.s32 128, 128
      %18 = vsyncadd [#allocation3], %s17
      %s20 = sshll.u32 [#allocation2], 4
      %s21 = int_to_ptr.vmem [resolvable:$true] %s20
      %23 = dma.hbm_to_vmem [thread:$0]  %s0, 128, %s21, [#allocation3]
    $region5: #{tpu_custom_call.1} parent=1 // pred_fallthru
      _
    // Predicated region
    $region6: #{tpu_custom_call.1} parent=1 // pred_check
      _
    $region7: #{tpu_custom_call.1} parent=1 // pred_check_branch
      %25 = sbr.rel (0) target = $region9
    $region8: #{tpu_custom_call.1} parent=1 // pred_region
      %s27 = ssub.s32 4096, 4096
      %28 = vsyncadd [#allocation6], %s27
      %s29 = sshll.u32 [#allocation5], 4
      %s30 = int_to_ptr.vmem [resolvable:$true] %s29
      %35 = dma.hbm_to_vmem [thread:$0]  %s1, 4096, %s30, [#allocation6], 256, 256, 16
    $region9: #{tpu_custom_call.1} parent=1 // pred_fallthru
      _
    // Predicated region
    $region10: #{tpu_custom_call.1} parent=1 // pred_check
      _
    $region11: #{tpu_custom_call.1} parent=1 // pred_check_branch
      %37 = sbr.rel (0) target = $region13
    $region12: #{tpu_custom_call.1} parent=1 // pred_region
      _
    $region13: #{tpu_custom_call.1} parent=1 // pred_fallthru
      _
    // Predicated region
    $region14: #{tpu_custom_call.1} parent=1 // pred_check
      _
    $region15: #{tpu_custom_call.1} parent=1 // pred_check_branch
      %39 = sbr.rel (0) target = $region17
    $region16: #{tpu_custom_call.1} parent=1 // pred_region
      _
    $region17: #{tpu_custom_call.1} parent=1 // pred_fallthru
      _
    // Predicated region
    $region18: #{tpu_custom_call.1} parent=1 // pred_check
      _
    $region19: #{tpu_custom_call.1} parent=1 // pred_check_branch
      %41 = sbr.rel (0) target = $region21
    $region20: #{tpu_custom_call.1} parent=1 // pred_region
      %s43 = ssub.s32 4096, 4096
      %44 = vsyncadd [#allocation6], %s43
      %s45 = sshll.u32 [#allocation7], 4
      %s46 = int_to_ptr.vmem [resolvable:$true] %s45
      %51 = dma.hbm_to_vmem [thread:$0]  %s4, 4096, %s46, [#allocation6], 128, 128, 8
    $region21: #{tpu_custom_call.1} parent=1 // pred_fallthru
      _
    // Predicated region
    $region22: #{tpu_custom_call.1} parent=1 // pred_check
      _
    $region23: #{tpu_custom_call.1} parent=1 // pred_check_branch
      %53 = sbr.rel (0) target = $region25
    $region24: #{tpu_custom_call.1} parent=1 // pred_region
      _
    $region25: #{tpu_custom_call.1} parent=1 // pred_fallthru
      _
    // Predicated region
    $region26: #{tpu_custom_call.1} parent=1 // pred_check
      _
    $region27: #{tpu_custom_call.1} parent=1 // pred_check_branch
      %55 = sbr.rel (0) target = $region29
    $region28: #{tpu_custom_call.1} parent=1 // pred_region
      %56 = dma.done [#allocation3], 128
    $region29: #{tpu_custom_call.1} parent=1 // pred_fallthru
      _
    // Predicated region
    $region30: #{tpu_custom_call.1} parent=1 // pred_check
      _
    $region31: #{tpu_custom_call.1} parent=1 // pred_check_branch
      %58 = sbr.rel (0) target = $region33
    $region32: #{tpu_custom_call.1} parent=1 // pred_region
      %59 = dma.done [#allocation6], 4096
    $region33: #{tpu_custom_call.1} parent=1 // pred_fallthru
      _
    // Predicated region
    $region34: #{tpu_custom_call.1} parent=1 // pred_check
      _
    $region35: #{tpu_custom_call.1} parent=1 // pred_check_branch
      %61 = sbr.rel (0) target = $region37
    $region36: #{tpu_custom_call.1} parent=1 // pred_region
      %62 = dma.done [#allocation6], 4096
    $region37: #{tpu_custom_call.1} parent=1 // pred_fallthru
      _
    %v63 = vld [vmem:[#allocation2] sm:$0xff]
    %v64 = vld [vmem:[#allocation5] sm:$0xff]
    %v65 = vld [vmem:[#allocation5 + $0x8] sm:$0xff]
    %v66 = vld [vmem:[#allocation5 + $0x10] sm:$0xff]
    %v67 = vld [vmem:[#allocation5 + $0x18] sm:$0xff]
    %v68 = vld [vmem:[#allocation5 + $0x20] sm:$0xff]
    %v69 = vld [vmem:[#allocation5 + $0x28] sm:$0xff]
    %v70 = vld [vmem:[#allocation5 + $0x30] sm:$0xff]
    %v71 = vld [vmem:[#allocation5 + $0x38] sm:$0xff]
    %v72 = vld [vmem:[#allocation5 + $0x40] sm:$0xff]
    %v73 = vld [vmem:[#allocation5 + $0x48] sm:$0xff]
    %v74 = vld [vmem:[#allocation5 + $0x50] sm:$0xff]
    %v75 = vld [vmem:[#allocation5 + $0x58] sm:$0xff]
    %v76 = vld [vmem:[#allocation5 + $0x60] sm:$0xff]
    %v77 = vld [vmem:[#allocation5 + $0x68] sm:$0xff]
    %v78 = vld [vmem:[#allocation5 + $0x70] sm:$0xff]
    %v79 = vld [vmem:[#allocation5 + $0x78] sm:$0xff]
    %v80 = vld [vmem:[#allocation5 + $0x80] sm:$0xff]
    %v81 = vld [vmem:[#allocation5 + $0x88] sm:$0xff]
    %v82 = vld [vmem:[#allocation5 + $0x90] sm:$0xff]
    %v83 = vld [vmem:[#allocation5 + $0x98] sm:$0xff]
    %v84 = vld [vmem:[#allocation5 + $0xa0] sm:$0xff]
    %v85 = vld [vmem:[#allocation5 + $0xa8] sm:$0xff]
    %v86 = vld [vmem:[#allocation5 + $0xb0] sm:$0xff]
    %v87 = vld [vmem:[#allocation5 + $0xb8] sm:$0xff]
    %v88 = vld [vmem:[#allocation5 + $0xc0] sm:$0xff]
    %v89 = vld [vmem:[#allocation5 + $0xc8] sm:$0xff]
    %v90 = vld [vmem:[#allocation5 + $0xd0] sm:$0xff]
    %v91 = vld [vmem:[#allocation5 + $0xd8] sm:$0xff]
    %v92 = vld [vmem:[#allocation5 + $0xe0] sm:$0xff]
    %v93 = vld [vmem:[#allocation5 + $0xe8] sm:$0xff]
    %v94 = vld [vmem:[#allocation5 + $0xf0] sm:$0xff]
    %v95 = vld [vmem:[#allocation5 + $0xf8] sm:$0xff]
    %96 = vmatprep.subr.mxu0 %v65
    %97 = vmatpush1.msra.mxu0 %v64
    %98 = vmatprep.subr.mxu0 %v67
    %99 = vmatpush1.msra.mxu0 %v66
    %100 = vmatprep.subr.mxu0 %v69
    %101 = vmatpush1.msra.mxu0 %v68
    %102 = vmatprep.subr.mxu0 %v71
    %103 = vmatpush1.msra.mxu0 %v70
    %104 = vmatprep.subr.mxu0 %v73
    %105 = vmatpush1.msra.mxu0 %v72
    %106 = vmatprep.subr.mxu0 %v75
    %107 = vmatpush1.msra.mxu0 %v74
    %108 = vmatprep.subr.mxu0 %v77
    %109 = vmatpush1.msra.mxu0 %v76
    %110 = vmatprep.subr.mxu0 %v79
    %111 = vmatpush1.msra.mxu0 %v78
    %112 = vmatprep.subr.mxu0 %v81
    %113 = vmatpush1.msra.mxu0 %v80
    %114 = vmatprep.subr.mxu0 %v83
    %115 = vmatpush1.msra.mxu0 %v82
    %116 = vmatprep.subr.mxu0 %v85
    %117 = vmatpush1.msra.mxu0 %v84
    %118 = vmatprep.subr.mxu0 %v87
    %119 = vmatpush1.msra.mxu0 %v86
    %120 = vmatprep.subr.mxu0 %v89
    %121 = vmatpush1.msra.mxu0 %v88
    %122 = vmatprep.subr.mxu0 %v91
    %123 = vmatpush1.msra.mxu0 %v90
    %124 = vmatprep.subr.mxu0 %v93
    %125 = vmatpush1.msra.mxu0 %v92
    %126 = vmatprep.subr.mxu0 %v95
    %127 = vmatpush1.msra.mxu0 %v94
    %128 = vmatprep.subr.mxu0 0.0
    %129 = vmatpush1.msra.mxu0 0.0
    %130 = vmatprep.subr.mxu0 0.0
    %131 = vmatpush1.msra.mxu0 0.0
    %132 = vmatprep.subr.mxu0 0.0
    %133 = vmatpush1.msra.mxu0 0.0
    %134 = vmatprep.subr.mxu0 0.0
    %135 = vmatpush1.msra.mxu0 0.0
    %136 = vmatprep.subr.mxu0 0.0
    %137 = vmatpush1.msra.mxu0 0.0
    %138 = vmatprep.subr.mxu0 0.0
    %139 = vmatpush1.msra.mxu0 0.0
    %140 = vmatprep.subr.mxu0 0.0
    %141 = vmatpush1.msra.mxu0 0.0
    %142 = vmatprep.subr.mxu0 0.0
    %143 = vmatpush1.msra.mxu0 0.0
    %144 = vmatprep.subr.mxu0 0.0
    %145 = vmatpush1.msra.mxu0 0.0
    %146 = vmatprep.subr.mxu0 0.0
    %147 = vmatpush1.msra.mxu0 0.0
    %148 = vmatprep.subr.mxu0 0.0
    %149 = vmatpush1.msra.mxu0 0.0
    %150 = vmatprep.subr.mxu0 0.0
    %151 = vmatpush1.msra.mxu0 0.0
    %152 = vmatprep.subr.mxu0 0.0
    %153 = vmatpush1.msra.mxu0 0.0
    %154 = vmatprep.subr.mxu0 0.0
    %155 = vmatpush1.msra.mxu0 0.0
    %156 = vmatprep.subr.mxu0 0.0
    %157 = vmatpush1.msra.mxu0 0.0
    %158 = vmatprep.subr.mxu0 0.0
    %159 = vmatpush1.msra.mxu0 0.0
    %160 = vmatprep.mubr.f32.mxu0 0.0
    %161 = vmatmul.mubr.f32.gmra.mrb[0].mxu0 %v63
    %v162 = vpop.f32.mrb[0].mxu0
    %v163 = vadd.f32 0.0, %v162
    %v164 = vpop.f32.mrb[0].mxu0
    %v165 = vadd.f32 0.0, %v164
    %166 = vdwg.mxu0
    %v167 = vrot.slane %v163, 4
    %v168 = vadd.f32 %v163, %v167
    %v169 = vrot.slane %v168, 2
    %v170 = vadd.f32 %v168, %v169
    %v171 = vrot.slane %v170, 1
    %v172 = vadd.f32 %v170, %v171
    %v173 = vrot.slane %v165, 4
    %v174 = vadd.f32 %v165, %v173
    %v175 = vrot.slane %v174, 2
    %v176 = vadd.f32 %v174, %v175
    %v177 = vrot.slane %v176, 1
    %v178 = vadd.f32 %v176, %v177
    %v179 = vrcp.pop 8.0
    %v180 = vmul.f32 %v172, %v179
    %v181 = vmul.f32 %v178, %v179
    %v182 = vsub.f32 %v163, %v180
    %v183 = vsub.f32 %v165, %v181
    %v184 = vmul.f32 %v182, %v182
    %v185 = vmul.f32 %v183, %v183
    %v186 = vrot.slane %v184, 4
    %v187 = vadd.f32 %v184, %v186
    %v188 = vrot.slane %v187, 2
    %v189 = vadd.f32 %v187, %v188
    %v190 = vrot.slane %v189, 1
    %v191 = vadd.f32 %v189, %v190
    %v192 = vrot.slane %v185, 4
    %v193 = vadd.f32 %v185, %v192
    %v194 = vrot.slane %v193, 2
    %v195 = vadd.f32 %v193, %v194
    %v196 = vrot.slane %v195, 1
    %v197 = vadd.f32 %v195, %v196
    %v198 = vmul.f32 %v191, %v179
    %v199 = vmul.f32 %v197, %v179
    %v200 = vld [vmem:[%s2] sm:$0x3]
    %v201 = vadd.f32 %v198, 1e-05
    %v202 = vadd.f32 %v199, 1e-05
    %v203 = vrsqrt.pop %v201
    %v204 = vrsqrt.pop %v202
    %v207 = vcombine.low %v203, %v204
    %v209 = vunpack.c.l.s4 1966171168
    %v210 = vunpack.c.0.s8 %v209
    %v211 = vlaneseq
    %v212 = vshrl.u32 %v211, 7
    %v213 = vsub.s32 %v210, %v212
    %v214 = vrot.slane %v207, %v213
    %v216 = vunpack.c.l.s4 1966171168
    %v217 = vunpack.c.0.s8 %v216
    %v218 = vlaneseq
    %v219 = vshrl.u32 %v218, 7
    %v220 = vsub.s32 %v217, %v219
    %v221 = vrot.slane %v214, %v220
    %v223 = vmul.f32 %v200, %v221
    %v225 = vlaneseq
    %v226 = vshrl.u32 %v225, 7
    %v227 = vsub.s32 0, %v226
    %v228 = vrot.slane %v223, %v227
    %v229 = vlaneseq
    %v230 = vshrl.u32 %v229, 7
    %v231 = vsub.s32 1, %v230
    %v232 = vrot.slane %v223, %v231
    %v235 = vmul.f32 %v182, %v228
    %v236 = vmul.f32 %v183, %v232
    %v237 = vld [vmem:[%s3] sm:$0x3]
    %v239 = vlaneseq
    %v240 = vshrl.u32 %v239, 7
    %v241 = vsub.s32 0, %v240
    %v242 = vrot.slane %v237, %v241
    %v243 = vlaneseq
    %v244 = vshrl.u32 %v243, 7
    %v245 = vsub.s32 1, %v244
    %v246 = vrot.slane %v237, %v245
    %v249 = vadd.f32 %v235, %v242
    %v250 = vadd.f32 %v236, %v246
    %v251 = vmax.f32 %v249, 0.0
    %v252 = vmax.f32 %v250, 0.0
    %v253 = vld [vmem:[#allocation7] sm:$0xff]
    %v254 = vld [vmem:[#allocation7 + $0x8] sm:$0xff]
    %v255 = vld [vmem:[#allocation7 + $0x10] sm:$0xff]
    %v256 = vld [vmem:[#allocation7 + $0x18] sm:$0xff]
    %v257 = vld [vmem:[#allocation7 + $0x20] sm:$0xff]
    %v258 = vld [vmem:[#allocation7 + $0x28] sm:$0xff]
    %v259 = vld [vmem:[#allocation7 + $0x30] sm:$0xff]
    %v260 = vld [vmem:[#allocation7 + $0x38] sm:$0xff]
    %v261 = vld [vmem:[#allocation7 + $0x40] sm:$0xff]
    %v262 = vld [vmem:[#allocation7 + $0x48] sm:$0xff]
    %v263 = vld [vmem:[#allocation7 + $0x50] sm:$0xff]
    %v264 = vld [vmem:[#allocation7 + $0x58] sm:$0xff]
    %v265 = vld [vmem:[#allocation7 + $0x60] sm:$0xff]
    %v266 = vld [vmem:[#allocation7 + $0x68] sm:$0xff]
    %v267 = vld [vmem:[#allocation7 + $0x70] sm:$0xff]
    %v268 = vld [vmem:[#allocation7 + $0x78] sm:$0xff]
    %v269 = vld [vmem:[#allocation7 + $0x80] sm:$0xff]
    %v270 = vld [vmem:[#allocation7 + $0x88] sm:$0xff]
    %v271 = vld [vmem:[#allocation7 + $0x90] sm:$0xff]
    %v272 = vld [vmem:[#allocation7 + $0x98] sm:$0xff]
    %v273 = vld [vmem:[#allocation7 + $0xa0] sm:$0xff]
    %v274 = vld [vmem:[#allocation7 + $0xa8] sm:$0xff]
    %v275 = vld [vmem:[#allocation7 + $0xb0] sm:$0xff]
    %v276 = vld [vmem:[#allocation7 + $0xb8] sm:$0xff]
    %v277 = vld [vmem:[#allocation7 + $0xc0] sm:$0xff]
    %v278 = vld [vmem:[#allocation7 + $0xc8] sm:$0xff]
    %v279 = vld [vmem:[#allocation7 + $0xd0] sm:$0xff]
    %v280 = vld [vmem:[#allocation7 + $0xd8] sm:$0xff]
    %v281 = vld [vmem:[#allocation7 + $0xe0] sm:$0xff]
    %v282 = vld [vmem:[#allocation7 + $0xe8] sm:$0xff]
    %v283 = vld [vmem:[#allocation7 + $0xf0] sm:$0xff]
    %v284 = vld [vmem:[#allocation7 + $0xf8] sm:$0xff]
    %v285 = vld [vmem:[%s5] sm:$0x1]
    %v287 = vlaneseq
    %v288 = vshrl.u32 %v287, 7
    %v289 = vsub.s32 0, %v288
    %v290 = vrot.slane %v285, %v289
    %292 = vmatprep.subr.mxu0 0.0
    %293 = vmatpush1.msra.mxu0 %v253
    %294 = vmatprep.subr.mxu0 0.0
    %295 = vmatpush1.msra.mxu0 %v254
    %296 = vmatprep.subr.mxu0 0.0
    %297 = vmatpush1.msra.mxu0 %v255
    %298 = vmatprep.subr.mxu0 0.0
    %299 = vmatpush1.msra.mxu0 %v256
    %300 = vmatprep.subr.mxu0 0.0
    %301 = vmatpush1.msra.mxu0 %v257
    %302 = vmatprep.subr.mxu0 0.0
    %303 = vmatpush1.msra.mxu0 %v258
    %304 = vmatprep.subr.mxu0 0.0
    %305 = vmatpush1.msra.mxu0 %v259
    %306 = vmatprep.subr.mxu0 0.0
    %307 = vmatpush1.msra.mxu0 %v260
    %308 = vmatprep.subr.mxu0 0.0
    %309 = vmatpush1.msra.mxu0 %v261
    %310 = vmatprep.subr.mxu0 0.0
    %311 = vmatpush1.msra.mxu0 %v262
    %312 = vmatprep.subr.mxu0 0.0
    %313 = vmatpush1.msra.mxu0 %v263
    %314 = vmatprep.subr.mxu0 0.0
    %315 = vmatpush1.msra.mxu0 %v264
    %316 = vmatprep.subr.mxu0 0.0
    %317 = vmatpush1.msra.mxu0 %v265
    %318 = vmatprep.subr.mxu0 0.0
    %319 = vmatpush1.msra.mxu0 %v266
    %320 = vmatprep.subr.mxu0 0.0
    %321 = vmatpush1.msra.mxu0 %v267
    %322 = vmatprep.subr.mxu0 0.0
    %323 = vmatpush1.msra.mxu0 %v268
    %324 = vmatprep.subr.mxu0 0.0
    %325 = vmatpush1.msra.mxu0 %v269
    %326 = vmatprep.subr.mxu0 0.0
    %327 = vmatpush1.msra.mxu0 %v270
    %328 = vmatprep.subr.mxu0 0.0
    %329 = vmatpush1.msra.mxu0 %v271
    %330 = vmatprep.subr.mxu0 0.0
    %331 = vmatpush1.msra.mxu0 %v272
    %332 = vmatprep.subr.mxu0 0.0
    %333 = vmatpush1.msra.mxu0 %v273
    %334 = vmatprep.subr.mxu0 0.0
    %335 = vmatpush1.msra.mxu0 %v274
    %336 = vmatprep.subr.mxu0 0.0
    %337 = vmatpush1.msra.mxu0 %v275
    %338 = vmatprep.subr.mxu0 0.0
    %339 = vmatpush1.msra.mxu0 %v276
    %340 = vmatprep.subr.mxu0 0.0
    %341 = vmatpush1.msra.mxu0 %v277
    %342 = vmatprep.subr.mxu0 0.0
    %343 = vmatpush1.msra.mxu0 %v278
    %344 = vmatprep.subr.mxu0 0.0
    %345 = vmatpush1.msra.mxu0 %v279
    %346 = vmatprep.subr.mxu0 0.0
    %347 = vmatpush1.msra.mxu0 %v280
    %348 = vmatprep.subr.mxu0 0.0
    %349 = vmatpush1.msra.mxu0 %v281
    %350 = vmatprep.subr.mxu0 0.0
    %351 = vmatpush1.msra.mxu0 %v282
    %352 = vmatprep.subr.mxu0 0.0
    %353 = vmatpush1.msra.mxu0 %v283
    %354 = vmatprep.subr.mxu0 0.0
    %355 = vmatpush1.msra.mxu0 %v284
    %356 = vmatprep.mubr.f32.mxu0 %v252
    %357 = vmatmul.mubr.f32.gmra.mrb[0].mxu0 %v251
    %v358 = vpop.f32.mrb[0].mxu0
    %v359 = vadd.f32 %v290, %v358
    %v360 = vpop.f32.mrb[0].mxu0
    %361 = vdwg.mxu0
    %362 = vst [vmem:[#allocation8] sm:$0xff] %v359
    // Predicated region
    $region38: #{tpu_custom_call.1} parent=1 // pred_check
      _
    $region39: #{tpu_custom_call.1} parent=1 // pred_check_branch
      %364 = sbr.rel (0) target = $region41
    $region40: #{tpu_custom_call.1} parent=1 // pred_region
      %s366 = ssub.s32 128, 128
      %367 = vsyncadd [#allocation4], %s366
      %s369 = sshll.u32 [#allocation8], 4
      %s370 = int_to_ptr.vmem [resolvable:$true] %s369
      %372 = dma.vmem_to_hbm [thread:$0]  %s370, 128, %s6, [#allocation4]
    $region41: #{tpu_custom_call.1} parent=1 // pred_fallthru
      _
    // Predicated region
    $region42: #{tpu_custom_call.1} parent=1 // pred_check
      _
    $region43: #{tpu_custom_call.1} parent=1 // pred_check_branch
      %374 = sbr.rel (0) target = $region45
    $region44: #{tpu_custom_call.1} parent=1 // pred_region
      %375 = dma.done [#allocation4], 128
    $region45: #{tpu_custom_call.1} parent=1 // pred_fallthru
      _
    %376 = vsyncpa [#allocation3], 1
    %377 = vsyncpa [#allocation6], 1
    %378 = vsyncpa [#allocation4], 1

</llo_original>
